<compile_context>
chip_gen: v6e
topology: v6e:2x2x1
jax: 0.10.0
libtpu: 0.0.40
codegen_flags: <defaults>
</compile_context>

<pallas_src>
import functools

import jax
import jax.numpy as jnp
from jax import lax
from jax.experimental import pallas as pl
from jax.experimental.pallas import tpu as pltpu

_ACTIVATIONS = {
    "ReLU": jax.nn.relu,
    "Tanh": jnp.tanh,
    "Sigmoid": jax.nn.sigmoid,
    "GELU": functools.partial(jax.nn.gelu, approximate=False),
    "LeakyReLU": jax.nn.leaky_relu,
}


def _round_up(x, m):
    return (x + m - 1) // m * m


# ---------------------------------------------------------------------------
# Dropout pre-pass (inverted dropout, training mode), hoisted out of the
# matmul's j/k loops.  Uniforms are generated with jax.random in the wrapper
# (pltpu.prng_* does not lower in interpret mode); the mask/scale is applied
# inside this Pallas kernel.
# ---------------------------------------------------------------------------
def _dropout_kernel(x_ref, u_ref, o_ref, *, p):
    x = x_ref[...]
    keep = u_ref[...] >= p
    scaled = x * (1.0 / (1.0 - p))
    o_ref[...] = jnp.where(keep, scaled, jnp.zeros_like(scaled)).astype(o_ref.dtype)


def _apply_dropout(x2, p, rng_key, tm, tk):
    M, K = x2.shape
    u = jax.random.uniform(rng_key, (M, K), dtype=jnp.float32)
    return pl.pallas_call(
        functools.partial(_dropout_kernel, p=p),
        out_shape=jax.ShapeDtypeStruct((M, K), x2.dtype),
        grid_spec=pltpu.PrefetchScalarGridSpec(
            num_scalar_prefetch=0,
            grid=(M // tm, K // tk),
            in_specs=[pl.BlockSpec((tm, tk), lambda i, k: (i, k)),
                      pl.BlockSpec((tm, tk), lambda i, k: (i, k))],
            out_specs=pl.BlockSpec((tm, tk), lambda i, k: (i, k)),
        ),
        compiler_params=pltpu.CompilerParams(
            dimension_semantics=("parallel", "parallel")),
    )(x2, u)


# ---------------------------------------------------------------------------
# Linear kernels.  Weight is kept in nn.Linear layout [N, K]; contraction is
# x[tm,tk] . w[tn,tk]^T via dot_general (MXU trans-B), accumulated in f32.
# ---------------------------------------------------------------------------
def _linear_kernel_single(x_ref, w_ref, *rest, activation, has_bias):
    """grid = (M//tm, N//tn); whole K in one tile — no scratch, no K loop."""
    if has_bias:
        b_ref, o_ref = rest
    else:
        (o_ref,) = rest
    y = lax.dot_general(x_ref[...], w_ref[...],
                        dimension_numbers=(((1,), (1,)), ((), ())),
                        preferred_element_type=jnp.float32)
    if has_bias:
        y = y + b_ref[...].astype(jnp.float32)
    if activation is not None:
        y = _ACTIVATIONS[activation](y)
    o_ref[...] = y.astype(o_ref.dtype)


def _linear_kernel_acc(x_ref, w_ref, *rest, n_k, activation, has_bias):
    """grid = (M//tm, N//tn, K//tk); accumulate over K tiles in f32 scratch."""
    if has_bias:
        b_ref, o_ref, acc_ref = rest
    else:
        o_ref, acc_ref = rest
    k = pl.program_id(2)

    @pl.when(k == 0)
    def _():
        acc_ref[...] = jnp.zeros_like(acc_ref)

    acc_ref[...] += lax.dot_general(x_ref[...], w_ref[...],
                                    dimension_numbers=(((1,), (1,)), ((), ())),
                                    preferred_element_type=jnp.float32)

    @pl.when(k == n_k - 1)
    def _():
        y = acc_ref[...]
        if has_bias:
            y = y + b_ref[...].astype(jnp.float32)
        if activation is not None:
            y = _ACTIVATIONS[activation](y)
        o_ref[...] = y.astype(o_ref.dtype)


# ---------------------------------------------------------------------------
# Wrapper: dropout (optional) -> linear -> activation (optional).
# ---------------------------------------------------------------------------
def linear_layer_forward(x, weight, bias=None, *, activation=None,
                         dropout=None, rng_key=None, training=True,
                         tm=256, tn=256, tk=512):
    """Forward pass of LinearLayer.

    x:      [..., in_features]
    weight: [out_features, in_features]   (nn.Linear layout, NOT transposed)
    bias:   [out_features] or None
    """
    *lead, K = x.shape
    N, Kw = weight.shape
    assert K == Kw, "in_features mismatch"
    M = 1
    for d in lead:
        M *= d

    # ---- tile selection (bounded; multiples of (8, 128)) ----
    tm = min(tm, _round_up(M, 8))
    M_pad = _round_up(M, tm)

    N_pad = _round_up(N, 128)
    tn = min(tn, N_pad)
    if N_pad % tn != 0:
        tn = 128

    K_pad = _round_up(K, 128)
    tk = min(tk, K_pad)
    if K_pad % tk != 0:
        tk = 256 if K_pad % 256 == 0 else 128
    n_k = K_pad // tk

    # ---- pad operands when shapes are not tile-aligned ----
    x2 = x.reshape(M, K)
    if M_pad != M or K_pad != K:
        x2 = jnp.pad(x2, ((0, M_pad - M), (0, K_pad - K)))
    w2 = weight
    if N_pad != N or K_pad != K:
        w2 = jnp.pad(weight, ((0, N_pad - N), (0, K_pad - K)))

    has_bias = bias is not None
    if has_bias:
        b2 = bias.reshape(1, N)
        if N_pad != N:
            b2 = jnp.pad(b2, ((0, 0), (0, N_pad - N)))

    # ---- optional dropout pre-pass (training-mode nn.Dropout on the input) --
    if dropout is not None and dropout > 0.0 and training:
        assert rng_key is not None, "dropout requires rng_key"
        x2 = _apply_dropout(x2, float(dropout), rng_key, tm, tk)

    grid_m = M_pad // tm
    grid_n = N_pad // tn

    if n_k == 1:
        kernel = functools.partial(_linear_kernel_single,
                                   activation=activation, has_bias=has_bias)
        grid = (grid_m, grid_n)
        in_specs = [pl.BlockSpec((tm, tk), lambda i, j: (i, 0)),
                    pl.BlockSpec((tn, tk), lambda i, j: (j, 0))]
        if has_bias:
            in_specs.append(pl.BlockSpec((1, tn), lambda i, j: (0, j)))
        out_spec = pl.BlockSpec((tm, tn), lambda i, j: (i, j))
        scratch = []
        dims = ("parallel", "parallel")
    else:
        kernel = functools.partial(_linear_kernel_acc, n_k=n_k,
                                   activation=activation, has_bias=has_bias)
        grid = (grid_m, grid_n, n_k)
        in_specs = [pl.BlockSpec((tm, tk), lambda i, j, k: (i, k)),
                    pl.BlockSpec((tn, tk), lambda i, j, k: (j, k))]
        if has_bias:
            in_specs.append(pl.BlockSpec((1, tn), lambda i, j, k: (0, j)))
        out_spec = pl.BlockSpec((tm, tn), lambda i, j, k: (i, j))
        scratch = [pltpu.VMEM((tm, tn), jnp.float32)]
        dims = ("parallel", "parallel", "arbitrary")

    operands = [x2, w2] + ([b2] if has_bias else [])

    out2 = pl.pallas_call(
        kernel,
        out_shape=jax.ShapeDtypeStruct((M_pad, N_pad), x.dtype),
        grid_spec=pltpu.PrefetchScalarGridSpec(
            num_scalar_prefetch=0,
            grid=grid,
            in_specs=in_specs,
            out_specs=out_spec,
            scratch_shapes=scratch,
        ),
        compiler_params=pltpu.CompilerParams(dimension_semantics=dims),
    )(*operands)

    if M_pad != M or N_pad != N:
        out2 = out2[:M, :N]
    return out2.reshape(*lead, N)


if __name__ == "__main__":
    # Shapes consistent with the module: batch=2, seq=8, in=256, out=128.
    B, S, IN, OUT = 2, 8, 256, 128
    key = jax.random.PRNGKey(0)
    kx, kw, kb, kd, kw2 = jax.random.split(key, 5)

    x = jax.random.normal(kx, (B, S, IN), dtype=jnp.float32)
    weight = jax.random.normal(kw, (OUT, IN), dtype=jnp.float32) * 0.05
    bias = jax.random.normal(kb, (OUT,), dtype=jnp.float32) * 0.05
    hi = jax.lax.Precision.HIGHEST

    # 1) bias + ReLU, no dropout (single-K-step fast path).
    y = linear_layer_forward(x, weight, bias, activation="ReLU", dropout=None)
    y = jax.block_until_ready(y)
    y_ref = jax.nn.relu(jnp.einsum("bsk,nk->bsn", x, weight, precision=hi) + bias)
    assert y.shape == (B, S, OUT)
    assert jnp.allclose(y, y_ref, rtol=2e-3, atol=2e-3), "mismatch (relu+bias)"

    # 2) no bias, no activation.
    y2 = linear_layer_forward(x, weight, None)
    y2 = jax.block_until_ready(y2)
    y2_ref = jnp.einsum("bsk,nk->bsn", x, weight, precision=hi)
    assert jnp.allclose(y2, y2_ref, rtol=2e-3, atol=2e-3), "mismatch (plain)"

    # 3) dropout path (training-mode inverted dropout via Pallas pre-pass).
    p = 0.1
    y_do = linear_layer_forward(x, weight, bias, activation="ReLU",
                                dropout=p, rng_key=kd)
    y_do = jax.block_until_ready(y_do)
    assert y_do.shape == (B, S, OUT)
    u = jax.random.uniform(kd, (B * S, IN), dtype=jnp.float32)
    x_drop = jnp.where(u >= p, x.reshape(B * S, IN) * (1.0 / (1.0 - p)), 0.0)
    y_do_ref = jax.nn.relu(
        jnp.einsum("mk,nk->mn", x_drop, weight, precision=hi) + bias
    ).reshape(B, S, OUT)
    assert jnp.allclose(y_do, y_do_ref, rtol=2e-3, atol=2e-3), "mismatch (dropout)"

    # 4) larger in_features to exercise the K-accumulation (multi-step) path.
    IN2 = 1024
    x_big = jax.random.normal(kx, (B, S, IN2), dtype=jnp.float32)
    w_big = jax.random.normal(kw2, (OUT, IN2), dtype=jnp.float32) * 0.03
    y3 = linear_layer_forward(x_big, w_big, bias, activation="Tanh")
    y3 = jax.block_until_ready(y3)
    y3_ref = jnp.tanh(jnp.einsum("bsk,nk->bsn", x_big, w_big, precision=hi) + bias)
    assert jnp.allclose(y3, y3_ref, rtol=2e-3, atol=2e-3), "mismatch (K-acc path)"

    print("KERNEL_OK")
</pallas_src>

<mosaic_0001>
module attributes {stable_mosaic.version = 11 : i64} {
  func.func @_linear_kernel_single(%arg0: i32, %arg1: i32, %arg2: memref<16x256xf32, #tpu.memory_space<vmem>>, %arg3: memref<128x256xf32, #tpu.memory_space<vmem>>, %arg4: memref<1x128xf32, #tpu.memory_space<vmem>>, %arg5: memref<16x128xf32, #tpu.memory_space<vmem>>) attributes {dimension_semantics = [#tpu.dimension_semantics<parallel>, #tpu.dimension_semantics<parallel>], iteration_bounds = array<i64: 1, 1>, scalar_prefetch = 0 : i64, scratch_operands = 0 : i64, tpu.core_type = #tpu.core_type<tc>, window_params = [{transform_indices = @transform_0, window_bounds = array<i64: 16, 256>}, {transform_indices = @transform_1, window_bounds = array<i64: 128, 256>}, {transform_indices = @transform_2, window_bounds = array<i64: 1, 128>}, {transform_indices = @transform_3, window_bounds = array<i64: 16, 128>}]} {
    %c0 = arith.constant 0 : index
    %c0_0 = arith.constant 0 : index
    %0 = vector.load %arg2[%c0, %c0_0] : memref<16x256xf32, #tpu.memory_space<vmem>>, vector<16x256xf32>
    %c0_1 = arith.constant 0 : index
    %c0_2 = arith.constant 0 : index
    %1 = vector.load %arg3[%c0_1, %c0_2] : memref<128x256xf32, #tpu.memory_space<vmem>>, vector<128x256xf32>
    %cst = arith.constant dense<0.000000e+00> : vector<16x128xf32>
    %2 = tpu.matmul %0, %1, %cst {dimension_numbers = #tpu.dot_dimension_numbers<[1], [1], [0], [0], [0, 0, 1, 0], [], []>} : vector<16x256xf32>, vector<128x256xf32>, vector<16x128xf32> -> vector<16x128xf32>
    %c0_3 = arith.constant 0 : index
    %c0_4 = arith.constant 0 : index
    %3 = vector.load %arg4[%c0_3, %c0_4] : memref<1x128xf32, #tpu.memory_space<vmem>>, vector<1x128xf32>
    %4 = vector.broadcast %3 : vector<1x128xf32> to vector<16x128xf32>
    %5 = arith.addf %2, %4 : vector<16x128xf32>
    %cst_5 = arith.constant 0.000000e+00 : f32
    %6 = vector.broadcast %cst_5 : f32 to vector<16x128xf32>
    %7 = arith.maximumf %5, %6 : vector<16x128xf32>
    %c0_6 = arith.constant 0 : index
    %c0_7 = arith.constant 0 : index
    %8 = vector.load %arg5[%c0_6, %c0_7] : memref<16x128xf32, #tpu.memory_space<vmem>>, vector<16x128xf32>
    tpu.vector_store %arg5[%c0_6, %c0_7], %7 {strides = array<i32>} : memref<16x128xf32, #tpu.memory_space<vmem>>, vector<16x128xf32>,
    return
  }
  func.func @transform_0(%arg0: i32, %arg1: i32) -> (i32, i32) {
    %c0_i32 = arith.constant 0 : i32
    %c0_i32_0 = arith.constant 0 : i32
    return %arg0, %c0_i32 : i32, i32
  }
  func.func @transform_1(%arg0: i32, %arg1: i32) -> (i32, i32) {
    %c0_i32 = arith.constant 0 : i32
    %c0_i32_0 = arith.constant 0 : i32
    return %arg1, %c0_i32 : i32, i32
  }
  func.func @transform_2(%arg0: i32, %arg1: i32) -> (i32, i32) {
    %c0_i32 = arith.constant 0 : i32
    %c0_i32_0 = arith.constant 0 : i32
    return %c0_i32, %arg1 : i32, i32
  }
  func.func @transform_3(%arg0: i32, %arg1: i32) -> (i32, i32) {
    %c0_i32 = arith.constant 0 : i32
    return %arg0, %arg1 : i32, i32
  }
}

</mosaic_0001>

<llo_original>
// kernel: tpu_custom_call.1
$region0: #{tpu_custom_call.1}
  #allocation0 [shape = 'u32[]', space=smem, size = 0x4, offset = 0x4, fixed_abs, tag = 'smem constant byte address 0x4 - core index']
  #allocation1 [shape = 'u32[144,128]{1,0:T(1,128)}', space=vmem, size = 0x12000, scoped, tag = 'internal scratch']
  %s0 = inlined_call_operand.hbm [shape: f32[16,256], index: 0, kind: input, shape index: {}]
  %s1 = inlined_call_operand.hbm [shape: f32[128,256], index: 1, kind: input, shape index: {}]
  %s2 = inlined_call_operand.vmem [shape: f32[1,128], index: 2, kind: input, shape index: {}]
  %s3 = inlined_call_operand.hbm [shape: f32[16,128], index: 3, kind: output, shape index: {}]
  %s4 = sld [smem:[#allocation0]]
  $region30: #{tpu_custom_call.1} parent=0
    _
  %s6 = ssub.s32 1, %s4
  %s7 = scalar_select 0, %s6, %s4
  $region1: #{tpu_custom_call.1} parent=0
    #allocation2 [shape = 'u8[16384]{0}', space=vmem, size = 0x4000, scoped, tag = 'input window, operand 0, single buffered']
    #allocation3 [shape = 's32[1]{0}', space=sflag, size = 0x4, scoped, tag = 'scoped memory for tpu_custom_call.1']
    #allocation4 [shape = 's32[1]{0}', space=sflag, size = 0x4, scoped, tag = 'scoped memory for tpu_custom_call.1']
    #allocation5 [shape = 'u8[131072]{0}', space=vmem, size = 0x20000, scoped, tag = 'input window, operand 1, single buffered']
    #allocation6 [shape = 's32[1]{0}', space=sflag, size = 0x4, scoped, tag = 'scoped memory for tpu_custom_call.1']
    #allocation7 [shape = 'u8[8192]{0}', space=vmem, size = 0x2000, scoped, tag = 'output window, operand 0, single buffered']
    %8 = vsyncpa [#allocation3], 0
    %9 = vsyncpa [#allocation6], 0
    %10 = vsyncpa [#allocation4], 0
    // Predicated region
    $region2: #{tpu_custom_call.1} parent=1 // pred_check
      _
    $region3: #{tpu_custom_call.1} parent=1 // pred_check_branch
      %12 = sbr.rel (0) target = $region5
    $region4: #{tpu_custom_call.1} parent=1 // pred_region
      %s14 = ssub.s32 512, 512
      %15 = vsyncadd [#allocation3], %s14
      %s16 = sshll.u32 [#allocation2], 4
      %s17 = int_to_ptr.vmem [resolvable:$true] %s16
      %22 = dma.hbm_to_vmem [thread:$0]  %s0, 512, %s17, [#allocation3], 256, 256, 16
    $region5: #{tpu_custom_call.1} parent=1 // pred_fallthru
      _
    // Predicated region
    $region6: #{tpu_custom_call.1} parent=1 // pred_check
      _
    $region7: #{tpu_custom_call.1} parent=1 // pred_check_branch
      %24 = sbr.rel (0) target = $region9
    $region8: #{tpu_custom_call.1} parent=1 // pred_region
      %s26 = ssub.s32 4096, 4096
      %27 = vsyncadd [#allocation6], %s26
      %s28 = sshll.u32 [#allocation5], 4
      %s29 = int_to_ptr.vmem [resolvable:$true] %s28
      %34 = dma.hbm_to_vmem [thread:$0]  %s1, 4096, %s29, [#allocation6], 256, 256, 16
    $region9: #{tpu_custom_call.1} parent=1 // pred_fallthru
      _
    // Predicated region
    $region10: #{tpu_custom_call.1} parent=1 // pred_check
      _
    $region11: #{tpu_custom_call.1} parent=1 // pred_check_branch
      %36 = sbr.rel (0) target = $region13
    $region12: #{tpu_custom_call.1} parent=1 // pred_region
      _
    $region13: #{tpu_custom_call.1} parent=1 // pred_fallthru
      _
    // Predicated region
    $region14: #{tpu_custom_call.1} parent=1 // pred_check
      _
    $region15: #{tpu_custom_call.1} parent=1 // pred_check_branch
      %38 = sbr.rel (0) target = $region17
    $region16: #{tpu_custom_call.1} parent=1 // pred_region
      %39 = dma.done [#allocation3], 512
    $region17: #{tpu_custom_call.1} parent=1 // pred_fallthru
      _
    // Predicated region
    $region18: #{tpu_custom_call.1} parent=1 // pred_check
      _
    $region19: #{tpu_custom_call.1} parent=1 // pred_check_branch
      %41 = sbr.rel (0) target = $region21
    $region20: #{tpu_custom_call.1} parent=1 // pred_region
      %42 = dma.done [#allocation6], 4096
    $region21: #{tpu_custom_call.1} parent=1 // pred_fallthru
      _
    %v43 = vld [vmem:[#allocation2] sm:$0xff]
    %v44 = vld [vmem:[#allocation2 + $0x8] sm:$0xff]
    %v45 = vld [vmem:[#allocation2 + $0x10] sm:$0xff]
    %v46 = vld [vmem:[#allocation2 + $0x18] sm:$0xff]
    %v47 = vld [vmem:[#allocation5] sm:$0xff]
    %v48 = vld [vmem:[#allocation5 + $0x8] sm:$0xff]
    %v49 = vld [vmem:[#allocation5 + $0x10] sm:$0xff]
    %v50 = vld [vmem:[#allocation5 + $0x18] sm:$0xff]
    %v51 = vld [vmem:[#allocation5 + $0x20] sm:$0xff]
    %v52 = vld [vmem:[#allocation5 + $0x28] sm:$0xff]
    %v53 = vld [vmem:[#allocation5 + $0x30] sm:$0xff]
    %v54 = vld [vmem:[#allocation5 + $0x38] sm:$0xff]
    %v55 = vld [vmem:[#allocation5 + $0x40] sm:$0xff]
    %v56 = vld [vmem:[#allocation5 + $0x48] sm:$0xff]
    %v57 = vld [vmem:[#allocation5 + $0x50] sm:$0xff]
    %v58 = vld [vmem:[#allocation5 + $0x58] sm:$0xff]
    %v59 = vld [vmem:[#allocation5 + $0x60] sm:$0xff]
    %v60 = vld [vmem:[#allocation5 + $0x68] sm:$0xff]
    %v61 = vld [vmem:[#allocation5 + $0x70] sm:$0xff]
    %v62 = vld [vmem:[#allocation5 + $0x78] sm:$0xff]
    %v63 = vld [vmem:[#allocation5 + $0x80] sm:$0xff]
    %v64 = vld [vmem:[#allocation5 + $0x88] sm:$0xff]
    %v65 = vld [vmem:[#allocation5 + $0x90] sm:$0xff]
    %v66 = vld [vmem:[#allocation5 + $0x98] sm:$0xff]
    %v67 = vld [vmem:[#allocation5 + $0xa0] sm:$0xff]
    %v68 = vld [vmem:[#allocation5 + $0xa8] sm:$0xff]
    %v69 = vld [vmem:[#allocation5 + $0xb0] sm:$0xff]
    %v70 = vld [vmem:[#allocation5 + $0xb8] sm:$0xff]
    %v71 = vld [vmem:[#allocation5 + $0xc0] sm:$0xff]
    %v72 = vld [vmem:[#allocation5 + $0xc8] sm:$0xff]
    %v73 = vld [vmem:[#allocation5 + $0xd0] sm:$0xff]
    %v74 = vld [vmem:[#allocation5 + $0xd8] sm:$0xff]
    %v75 = vld [vmem:[#allocation5 + $0xe0] sm:$0xff]
    %v76 = vld [vmem:[#allocation5 + $0xe8] sm:$0xff]
    %v77 = vld [vmem:[#allocation5 + $0xf0] sm:$0xff]
    %v78 = vld [vmem:[#allocation5 + $0xf8] sm:$0xff]
    %v79 = vld [vmem:[%s2] sm:$0x1]
    %v81 = vlaneseq
    %v82 = vshrl.u32 %v81, 7
    %v83 = vsub.s32 0, %v82
    %v84 = vrot.slane %v79, %v83
    %86 = vmatprep.subr.mxu0 %v78
    %87 = vmatpush1.xpose.msra.mxu0 %v77
    %88 = vmatprep.subr.mxu0 %v76
    %89 = vmatpush1.xpose.msra.mxu0 %v75
    %90 = vmatprep.subr.mxu0 %v74
    %91 = vmatpush1.xpose.msra.mxu0 %v73
    %92 = vmatprep.subr.mxu0 %v72
    %93 = vmatpush1.xpose.msra.mxu0 %v71
    %94 = vmatprep.subr.mxu0 %v70
    %95 = vmatpush1.xpose.msra.mxu0 %v69
    %96 = vmatprep.subr.mxu0 %v68
    %97 = vmatpush1.xpose.msra.mxu0 %v67
    %98 = vmatprep.subr.mxu0 %v66
    %99 = vmatpush1.xpose.msra.mxu0 %v65
    %100 = vmatprep.subr.mxu0 %v64
    %101 = vmatpush1.xpose.msra.mxu0 %v63
    %102 = vmatprep.subr.mxu0 %v62
    %103 = vmatpush1.xpose.msra.mxu0 %v61
    %104 = vmatprep.subr.mxu0 %v60
    %105 = vmatpush1.xpose.msra.mxu0 %v59
    %106 = vmatprep.subr.mxu0 %v58
    %107 = vmatpush1.xpose.msra.mxu0 %v57
    %108 = vmatprep.subr.mxu0 %v56
    %109 = vmatpush1.xpose.msra.mxu0 %v55
    %110 = vmatprep.subr.mxu0 %v54
    %111 = vmatpush1.xpose.msra.mxu0 %v53
    %112 = vmatprep.subr.mxu0 %v52
    %113 = vmatpush1.xpose.msra.mxu0 %v51
    %114 = vmatprep.subr.mxu0 %v50
    %115 = vmatpush1.xpose.msra.mxu0 %v49
    %116 = vmatprep.subr.mxu0 %v48
    %117 = vmatpush1.xpose.msra.mxu0 %v47
    %118 = vmatprep.subr.mxu0 0.0
    %119 = vmatpush2.xpose.msra.mxu0 0.0
    %120 = vmatprep.subr.mxu0 0.0
    %121 = vmatpush2.xpose.msra.mxu0 0.0
    %122 = vmatprep.subr.mxu0 0.0
    %123 = vmatpush2.xpose.msra.mxu0 0.0
    %124 = vmatprep.subr.mxu0 0.0
    %125 = vmatpush2.xpose.msra.mxu0 0.0
    %126 = vmatprep.subr.mxu0 0.0
    %127 = vmatpush2.xpose.msra.mxu0 0.0
    %128 = vmatprep.subr.mxu0 0.0
    %129 = vmatpush2.xpose.msra.mxu0 0.0
    %130 = vmatprep.subr.mxu0 0.0
    %131 = vmatpush2.xpose.msra.mxu0 0.0
    %132 = vmatprep.subr.mxu0 0.0
    %133 = vmatpush2.xpose.msra.mxu0 0.0
    %134 = vmatprep.subr.mxu0 0.0
    %135 = vmatpush2.xpose.msra.mxu0 0.0
    %136 = vmatprep.subr.mxu0 0.0
    %137 = vmatpush2.xpose.msra.mxu0 0.0
    %138 = vmatprep.subr.mxu0 0.0
    %139 = vmatpush2.xpose.msra.mxu0 0.0
    %140 = vmatprep.subr.mxu0 0.0
    %141 = vmatpush2.xpose.msra.mxu0 0.0
    %142 = vmatprep.subr.mxu0 0.0
    %143 = vmatpush2.xpose.msra.mxu0 0.0
    %144 = vmatprep.subr.mxu0 0.0
    %145 = vmatpush2.xpose.msra.mxu0 0.0
    %146 = vmatprep.subr.mxu0 0.0
    %147 = vmatpush2.xpose.msra.mxu0 0.0
    %148 = vmatprep.subr.mxu0 0.0
    %149 = vmatpush2.xpose.msra.mxu0 0.0
    %150 = vmatprep.mubr.f32.mxu0 %v44
    %151 = vmatmul.mubr.f32.gmra.mxu0 %v43
    %v152 = vpop.f32.mrf.mxu0
    %v153 = vadd.f32 %v84, %v152
    %v154 = vpop.f32.mrf.mxu0
    %155 = vmatprep.mubr.f32.mxu0 %v46
    %156 = vmatmul.mubr.f32.gmra.mxu0 %v45
    %v157 = vpop.f32.mrf.mxu0
    %v158 = vadd.f32 %v84, %v157
    %v159 = vpop.f32.mrf.mxu0
    %160 = vdwg.mxu0
    %v161 = vmax.f32 %v153, 0.0
    %v162 = vmax.f32 %v158, 0.0
    %163 = vst [vmem:[#allocation7] sm:$0xff] %v161
    %164 = vst [vmem:[#allocation7 + $0x8] sm:$0xff] %v162
    // Predicated region
    $region22: #{tpu_custom_call.1} parent=1 // pred_check
      _
    $region23: #{tpu_custom_call.1} parent=1 // pred_check_branch
      %166 = sbr.rel (0) target = $region25
    $region24: #{tpu_custom_call.1} parent=1 // pred_region
      %s168 = ssub.s32 256, 256
      %169 = vsyncadd [#allocation4], %s168
      %s170 = sshll.u32 [#allocation7], 4
      %s171 = int_to_ptr.vmem [resolvable:$true] %s170
      %176 = dma.vmem_to_hbm [thread:$0]  %s171, 256, %s3, [#allocation4], 128, 128, 8
    $region25: #{tpu_custom_call.1} parent=1 // pred_fallthru
      _
    // Predicated region
    $region26: #{tpu_custom_call.1} parent=1 // pred_check
      _
    $region27: #{tpu_custom_call.1} parent=1 // pred_check_branch
      %178 = sbr.rel (0) target = $region29
    $region28: #{tpu_custom_call.1} parent=1 // pred_region
      %179 = dma.done [#allocation4], 256
    $region29: #{tpu_custom_call.1} parent=1 // pred_fallthru
      _
    %180 = vsyncpa [#allocation3], 1
    %181 = vsyncpa [#allocation6], 1
    %182 = vsyncpa [#allocation4], 1

</llo_original>
